<compile_context>
chip_gen: v6e
topology: v6e:2x2x1
jax: 0.10.0
libtpu: 0.0.40
codegen_flags: <defaults>
</compile_context>

<pallas_src>
import functools

import jax
import jax.numpy as jnp
from jax.experimental import pallas as pl
from jax.experimental.pallas import tpu as pltpu


def _round_up(n, m):
    return ((n + m - 1) // m) * m


def _mlp_kernel(x_ref, w1_ref, b1_ref, w2_ref, b2_ref, w3_ref, b3_ref, o_ref):
    # Layer 1: (bb, Kp) @ (Kp, 128) in bf16, f32 accumulation, + bias, ReLU.
    h1 = jnp.dot(x_ref[...], w1_ref[...], preferred_element_type=jnp.float32)
    h1 = jnp.maximum(h1 + b1_ref[...], 0.0)
    # Layer 2: (bb, 128) @ (128, 256), bf16 operands, f32 accumulation, ReLU.
    h2 = jnp.dot(h1.astype(jnp.bfloat16), w2_ref[...],
                 preferred_element_type=jnp.float32)
    h2 = jnp.maximum(h2 + b2_ref[...], 0.0)
    # Layer 3: (bb, 256) @ (256, Np), no activation; output stays f32 and is
    # written to a lane-dense (multiple-of-128) padded tile.
    out = jnp.dot(h2.astype(jnp.bfloat16), w3_ref[...],
                  preferred_element_type=jnp.float32)
    o_ref[...] = out + b3_ref[...]


@functools.partial(jax.jit, static_argnames=("block_b",))
def description_feed_forward(x, w1, b1, w2, b2, w3, b3, *, block_b=256):
    """Pallas implementation of DescriptionFeedForward.forward.

    x:  (B, vector_size) float32
    w1: (vector_size, 128), b1: (1, 128)
    w2: (128, 256),         b2: (1, 256)
    w3: (256, output_dim),  b3: (1, output_dim)
    returns (B, output_dim) float32
    """
    B, vector_size = x.shape
    h1_dim = w1.shape[1]          # 128
    h2_dim = w2.shape[1]          # 256
    output_dim = w3.shape[1]

    # Lane-dense padding for the layer-1 contraction dim and the output dim.
    k_pad = _round_up(vector_size, 128)
    n_pad = _round_up(output_dim, 128)

    # Batch tile: at most `block_b`, but no bigger than the (sublane-aligned)
    # batch itself; batch is zero-padded to a whole number of tiles.
    eff_block_b = _round_up(min(block_b, _round_up(B, 8)), 8)
    b_pad = _round_up(B, eff_block_b)
    grid = (b_pad // eff_block_b,)

    # bf16 operands for the MXU; zero-padding keeps numerics identical.
    x_p = jnp.zeros((b_pad, k_pad), jnp.bfloat16)
    x_p = x_p.at[:B, :vector_size].set(x.astype(jnp.bfloat16))
    w1_p = jnp.zeros((k_pad, h1_dim), jnp.bfloat16)
    w1_p = w1_p.at[:vector_size, :].set(w1.astype(jnp.bfloat16))
    w2_p = w2.astype(jnp.bfloat16)
    w3_p = jnp.zeros((h2_dim, n_pad), jnp.bfloat16)
    w3_p = w3_p.at[:, :output_dim].set(w3.astype(jnp.bfloat16))
    # Biases stay f32 (added to the f32 accumulator).
    b1_p = b1.astype(jnp.float32)
    b2_p = b2.astype(jnp.float32)
    b3_p = jnp.zeros((1, n_pad), jnp.float32)
    b3_p = b3_p.at[:, :output_dim].set(b3.astype(jnp.float32))

    full = lambda shape: pl.BlockSpec(shape, lambda i: tuple(0 for _ in shape))

    out_padded = pl.pallas_call(
        _mlp_kernel,
        out_shape=jax.ShapeDtypeStruct((b_pad, n_pad), jnp.float32),
        grid_spec=pl.GridSpec(
            grid=grid,
            in_specs=[
                pl.BlockSpec((eff_block_b, k_pad), lambda i: (i, 0)),  # x tile
                full((k_pad, h1_dim)),                                 # w1
                full((1, h1_dim)),                                     # b1
                full((h1_dim, h2_dim)),                                # w2
                full((1, h2_dim)),                                     # b2
                full((h2_dim, n_pad)),                                 # w3
                full((1, n_pad)),                                      # b3
            ],
            out_specs=pl.BlockSpec((eff_block_b, n_pad), lambda i: (i, 0)),
        ),
        compiler_params=pltpu.CompilerParams(
            dimension_semantics=("parallel",),
        ),
    )(x_p, w1_p, b1_p, w2_p, b2_p, w3_p, b3_p)

    return out_padded[:B, :output_dim]


def init_params(key, vector_size, output_dim, dtype=jnp.float32):
    """Deterministic synthetic init (shapes match the nn.Linear layers)."""
    k1, k2, k3, k4, k5, k6 = jax.random.split(key, 6)
    # Stored as (in, out); equivalent to PyTorch's (out, in) transposed.
    w1 = jax.random.normal(k1, (vector_size, 128), dtype) * (1.0 / jnp.sqrt(vector_size))
    b1 = jax.random.normal(k2, (1, 128), dtype) * 0.01
    w2 = jax.random.normal(k3, (128, 256), dtype) * (1.0 / jnp.sqrt(128.0))
    b2 = jax.random.normal(k4, (1, 256), dtype) * 0.01
    w3 = jax.random.normal(k5, (256, output_dim), dtype) * (1.0 / jnp.sqrt(256.0))
    b3 = jax.random.normal(k6, (1, output_dim), dtype) * 0.01
    return w1, b1, w2, b2, w3, b3


def reference_forward(x, w1, b1, w2, b2, w3, b3):
    h = jnp.maximum(x @ w1 + b1, 0.0)
    h = jnp.maximum(h @ w2 + b2, 0.0)
    return h @ w3 + b3


if __name__ == "__main__":
    key = jax.random.PRNGKey(0)
    kx, kp = jax.random.split(key)

    batch = 16
    vector_size = 64
    output_dim = 32

    x = jax.random.normal(kx, (batch, vector_size), jnp.float32)
    params = init_params(kp, vector_size, output_dim)

    out = description_feed_forward(x, *params)
    out = jax.block_until_ready(out)

    ref = reference_forward(x, *params)
    assert out.shape == (batch, output_dim)
    max_err = float(jnp.max(jnp.abs(out - ref)))
    # bf16 MXU operands with f32 accumulation -> ~1e-2 relative error budget.
    assert jnp.allclose(out, ref, atol=5e-2, rtol=5e-2), (
        f"mismatch vs JAX f32 reference (max abs err {max_err})")

    print("KERNEL_OK")
</pallas_src>

<mosaic_0001>
module attributes {stable_mosaic.version = 11 : i64} {
  func.func @_mlp_kernel(%arg0: i32, %arg1: memref<16x128xbf16, #tpu.memory_space<vmem>>, %arg2: memref<128x128xbf16, #tpu.memory_space<vmem>>, %arg3: memref<1x128xf32, #tpu.memory_space<vmem>>, %arg4: memref<128x256xbf16, #tpu.memory_space<vmem>>, %arg5: memref<1x256xf32, #tpu.memory_space<vmem>>, %arg6: memref<256x128xbf16, #tpu.memory_space<vmem>>, %arg7: memref<1x128xf32, #tpu.memory_space<vmem>>, %arg8: memref<16x128xf32, #tpu.memory_space<vmem>>) attributes {dimension_semantics = [#tpu.dimension_semantics<parallel>], iteration_bounds = array<i64: 1>, scalar_prefetch = 0 : i64, scratch_operands = 0 : i64, tpu.core_type = #tpu.core_type<tc>, window_params = [{transform_indices = @transform_0, window_bounds = array<i64: 16, 128>}, {pipeline_mode = #tpu.pipeline_mode<synchronous>, transform_indices = @transform_1, window_bounds = array<i64: 128, 128>}, {pipeline_mode = #tpu.pipeline_mode<synchronous>, transform_indices = @transform_2, window_bounds = array<i64: 1, 128>}, {pipeline_mode = #tpu.pipeline_mode<synchronous>, transform_indices = @transform_3, window_bounds = array<i64: 128, 256>}, {pipeline_mode = #tpu.pipeline_mode<synchronous>, transform_indices = @transform_4, window_bounds = array<i64: 1, 256>}, {pipeline_mode = #tpu.pipeline_mode<synchronous>, transform_indices = @transform_5, window_bounds = array<i64: 256, 128>}, {pipeline_mode = #tpu.pipeline_mode<synchronous>, transform_indices = @transform_6, window_bounds = array<i64: 1, 128>}, {transform_indices = @transform_7, window_bounds = array<i64: 16, 128>}]} {
    %c0 = arith.constant 0 : index
    %c0_0 = arith.constant 0 : index
    %0 = vector.load %arg1[%c0, %c0_0] : memref<16x128xbf16, #tpu.memory_space<vmem>>, vector<16x128xbf16>
    %c0_1 = arith.constant 0 : index
    %c0_2 = arith.constant 0 : index
    %1 = vector.load %arg2[%c0_1, %c0_2] : memref<128x128xbf16, #tpu.memory_space<vmem>>, vector<128x128xbf16>
    %cst = arith.constant dense<0.000000e+00> : vector<16x128xf32>
    %2 = tpu.matmul %0, %1, %cst {dimension_numbers = #tpu.dot_dimension_numbers<[1], [0], [0], [1], [0, 0, 1, 1], [], []>} : vector<16x128xbf16>, vector<128x128xbf16>, vector<16x128xf32> -> vector<16x128xf32>
    %c0_3 = arith.constant 0 : index
    %c0_4 = arith.constant 0 : index
    %3 = vector.load %arg3[%c0_3, %c0_4] : memref<1x128xf32, #tpu.memory_space<vmem>>, vector<1x128xf32>
    %4 = vector.broadcast %3 : vector<1x128xf32> to vector<16x128xf32>
    %5 = arith.addf %2, %4 : vector<16x128xf32>
    %cst_5 = arith.constant 0.000000e+00 : f32
    %6 = vector.broadcast %cst_5 : f32 to vector<16x128xf32>
    %7 = arith.maximumf %5, %6 : vector<16x128xf32>
    %8 = arith.truncf %7 : vector<16x128xf32> to vector<16x128xbf16>
    %c0_6 = arith.constant 0 : index
    %c0_7 = arith.constant 0 : index
    %9 = vector.load %arg4[%c0_6, %c0_7] : memref<128x256xbf16, #tpu.memory_space<vmem>>, vector<128x256xbf16>
    %cst_8 = arith.constant dense<0.000000e+00> : vector<16x256xf32>
    %10 = tpu.matmul %8, %9, %cst_8 {dimension_numbers = #tpu.dot_dimension_numbers<[1], [0], [0], [1], [0, 0, 1, 1], [], []>} : vector<16x128xbf16>, vector<128x256xbf16>, vector<16x256xf32> -> vector<16x256xf32>
    %c0_9 = arith.constant 0 : index
    %c0_10 = arith.constant 0 : index
    %11 = vector.load %arg5[%c0_9, %c0_10] : memref<1x256xf32, #tpu.memory_space<vmem>>, vector<1x256xf32>
    %12 = vector.broadcast %11 : vector<1x256xf32> to vector<16x256xf32>
    %13 = arith.addf %10, %12 : vector<16x256xf32>
    %cst_11 = arith.constant 0.000000e+00 : f32
    %14 = vector.broadcast %cst_11 : f32 to vector<16x256xf32>
    %15 = arith.maximumf %13, %14 : vector<16x256xf32>
    %16 = arith.truncf %15 : vector<16x256xf32> to vector<16x256xbf16>
    %c0_12 = arith.constant 0 : index
    %c0_13 = arith.constant 0 : index
    %17 = vector.load %arg6[%c0_12, %c0_13] : memref<256x128xbf16, #tpu.memory_space<vmem>>, vector<256x128xbf16>
    %cst_14 = arith.constant dense<0.000000e+00> : vector<16x128xf32>
    %18 = tpu.matmul %16, %17, %cst_14 {dimension_numbers = #tpu.dot_dimension_numbers<[1], [0], [0], [1], [0, 0, 1, 1], [], []>} : vector<16x256xbf16>, vector<256x128xbf16>, vector<16x128xf32> -> vector<16x128xf32>
    %c0_15 = arith.constant 0 : index
    %c0_16 = arith.constant 0 : index
    %19 = vector.load %arg7[%c0_15, %c0_16] : memref<1x128xf32, #tpu.memory_space<vmem>>, vector<1x128xf32>
    %20 = vector.broadcast %19 : vector<1x128xf32> to vector<16x128xf32>
    %21 = arith.addf %18, %20 : vector<16x128xf32>
    %c0_17 = arith.constant 0 : index
    %c0_18 = arith.constant 0 : index
    %22 = vector.load %arg8[%c0_17, %c0_18] : memref<16x128xf32, #tpu.memory_space<vmem>>, vector<16x128xf32>
    tpu.vector_store %arg8[%c0_17, %c0_18], %21 {strides = array<i32>} : memref<16x128xf32, #tpu.memory_space<vmem>>, vector<16x128xf32>,
    return
  }
  func.func @transform_0(%arg0: i32) -> (i32, i32) {
    %c0_i32 = arith.constant 0 : i32
    %c0_i32_0 = arith.constant 0 : i32
    return %arg0, %c0_i32 : i32, i32
  }
  func.func @transform_1(%arg0: i32) -> (i32, i32) {
    %c0_i32 = arith.constant 0 : i32
    %c0_i32_0 = arith.constant 0 : i32
    %c0_i32_1 = arith.constant 0 : i32
    return %c0_i32, %c0_i32_0 : i32, i32
  }
  func.func @transform_2(%arg0: i32) -> (i32, i32) {
    %c0_i32 = arith.constant 0 : i32
    %c0_i32_0 = arith.constant 0 : i32
    %c0_i32_1 = arith.constant 0 : i32
    return %c0_i32, %c0_i32_0 : i32, i32
  }
  func.func @transform_3(%arg0: i32) -> (i32, i32) {
    %c0_i32 = arith.constant 0 : i32
    %c0_i32_0 = arith.constant 0 : i32
    %c0_i32_1 = arith.constant 0 : i32
    return %c0_i32, %c0_i32_0 : i32, i32
  }
  func.func @transform_4(%arg0: i32) -> (i32, i32) {
    %c0_i32 = arith.constant 0 : i32
    %c0_i32_0 = arith.constant 0 : i32
    %c0_i32_1 = arith.constant 0 : i32
    return %c0_i32, %c0_i32_0 : i32, i32
  }
  func.func @transform_5(%arg0: i32) -> (i32, i32) {
    %c0_i32 = arith.constant 0 : i32
    %c0_i32_0 = arith.constant 0 : i32
    %c0_i32_1 = arith.constant 0 : i32
    return %c0_i32, %c0_i32_0 : i32, i32
  }
  func.func @transform_6(%arg0: i32) -> (i32, i32) {
    %c0_i32 = arith.constant 0 : i32
    %c0_i32_0 = arith.constant 0 : i32
    %c0_i32_1 = arith.constant 0 : i32
    return %c0_i32, %c0_i32_0 : i32, i32
  }
  func.func @transform_7(%arg0: i32) -> (i32, i32) {
    %c0_i32 = arith.constant 0 : i32
    %c0_i32_0 = arith.constant 0 : i32
    return %arg0, %c0_i32 : i32, i32
  }
}

</mosaic_0001>

<llo_original>
// kernel: description_feed_forward.1
$region0: #{description_feed_forward.1}
  #allocation0 [shape = 'u32[]', space=smem, size = 0x4, offset = 0x4, fixed_abs, tag = 'smem constant byte address 0x4 - core index']
  #allocation1 [shape = 'u32[144,128]{1,0:T(1,128)}', space=vmem, size = 0x12000, scoped, tag = 'internal scratch']
  %s0 = inlined_call_operand.vmem [shape: bf16[16,128], index: 0, kind: input, shape index: {}]
  %s1 = inlined_call_operand.vmem [shape: bf16[128,128], index: 1, kind: input, shape index: {}]
  %s2 = inlined_call_operand.vmem [shape: f32[1,128], index: 2, kind: input, shape index: {}]
  %s3 = inlined_call_operand.vmem [shape: bf16[128,256], index: 3, kind: input, shape index: {}]
  %s4 = inlined_call_operand.vmem [shape: f32[1,256], index: 4, kind: input, shape index: {}]
  %s5 = inlined_call_operand.vmem [shape: bf16[256,128], index: 5, kind: input, shape index: {}]
  %s6 = inlined_call_operand.vmem [shape: f32[1,128], index: 6, kind: input, shape index: {}]
  %s7 = inlined_call_operand.hbm [shape: f32[16,128], index: 7, kind: output, shape index: {}]
  %s8 = sld [smem:[#allocation0]]
  $region38: #{description_feed_forward.1} parent=0
    _
  %s10 = ssub.s32 1, %s8
  %s11 = scalar_select 0, %s10, %s8
  $region1: #{description_feed_forward.1} parent=0
    #allocation2 [shape = 'u8[8192]{0}', space=vmem, size = 0x2000, scoped, tag = 'output window, operand 0, single buffered']
    #allocation3 [shape = 's32[1]{0}', space=sflag, size = 0x4, scoped, tag = 'scoped memory for description_feed_forward.1']
    %12 = vsyncpa [#allocation3], 0
    // Predicated region
    $region2: #{description_feed_forward.1} parent=1 // pred_check
      _
    $region3: #{description_feed_forward.1} parent=1 // pred_check_branch
      %14 = sbr.rel (0) target = $region5
    $region4: #{description_feed_forward.1} parent=1 // pred_region
      _
    $region5: #{description_feed_forward.1} parent=1 // pred_fallthru
      _
    // Predicated region
    $region6: #{description_feed_forward.1} parent=1 // pred_check
      _
    $region7: #{description_feed_forward.1} parent=1 // pred_check_branch
      %16 = sbr.rel (0) target = $region9
    $region8: #{description_feed_forward.1} parent=1 // pred_region
      _
    $region9: #{description_feed_forward.1} parent=1 // pred_fallthru
      _
    // Predicated region
    $region10: #{description_feed_forward.1} parent=1 // pred_check
      _
    $region11: #{description_feed_forward.1} parent=1 // pred_check_branch
      %18 = sbr.rel (0) target = $region13
    $region12: #{description_feed_forward.1} parent=1 // pred_region
      _
    $region13: #{description_feed_forward.1} parent=1 // pred_fallthru
      _
    // Predicated region
    $region14: #{description_feed_forward.1} parent=1 // pred_check
      _
    $region15: #{description_feed_forward.1} parent=1 // pred_check_branch
      %20 = sbr.rel (0) target = $region17
    $region16: #{description_feed_forward.1} parent=1 // pred_region
      _
    $region17: #{description_feed_forward.1} parent=1 // pred_fallthru
      _
    // Predicated region
    $region18: #{description_feed_forward.1} parent=1 // pred_check
      _
    $region19: #{description_feed_forward.1} parent=1 // pred_check_branch
      %22 = sbr.rel (0) target = $region21
    $region20: #{description_feed_forward.1} parent=1 // pred_region
      _
    $region21: #{description_feed_forward.1} parent=1 // pred_fallthru
      _
    // Predicated region
    $region22: #{description_feed_forward.1} parent=1 // pred_check
      _
    $region23: #{description_feed_forward.1} parent=1 // pred_check_branch
      %24 = sbr.rel (0) target = $region25
    $region24: #{description_feed_forward.1} parent=1 // pred_region
      _
    $region25: #{description_feed_forward.1} parent=1 // pred_fallthru
      _
    // Predicated region
    $region26: #{description_feed_forward.1} parent=1 // pred_check
      _
    $region27: #{description_feed_forward.1} parent=1 // pred_check_branch
      %26 = sbr.rel (0) target = $region29
    $region28: #{description_feed_forward.1} parent=1 // pred_region
      _
    $region29: #{description_feed_forward.1} parent=1 // pred_fallthru
      _
    %v28 = vld [vmem:[%s0] sm:$0xf]
    %v29 = vld [vmem:[%s0 + $0x4] sm:$0xf]
    %v30 = vld [vmem:[%s1] sm:$0xf]
    %v31 = vld [vmem:[%s1 + $0x4] sm:$0xf]
    %v32 = vld [vmem:[%s1 + $0x8] sm:$0xf]
    %v33 = vld [vmem:[%s1 + $0xc] sm:$0xf]
    %v34 = vld [vmem:[%s1 + $0x10] sm:$0xf]
    %v35 = vld [vmem:[%s1 + $0x14] sm:$0xf]
    %v36 = vld [vmem:[%s1 + $0x18] sm:$0xf]
    %v37 = vld [vmem:[%s1 + $0x1c] sm:$0xf]
    %v38 = vld [vmem:[%s1 + $0x20] sm:$0xf]
    %v39 = vld [vmem:[%s1 + $0x24] sm:$0xf]
    %v40 = vld [vmem:[%s1 + $0x28] sm:$0xf]
    %v41 = vld [vmem:[%s1 + $0x2c] sm:$0xf]
    %v42 = vld [vmem:[%s1 + $0x30] sm:$0xf]
    %v43 = vld [vmem:[%s1 + $0x34] sm:$0xf]
    %v44 = vld [vmem:[%s1 + $0x38] sm:$0xf]
    %v45 = vld [vmem:[%s1 + $0x3c] sm:$0xf]
    %v46 = vld [vmem:[%s2] sm:$0x1]
    %v48 = vlaneseq
    %v49 = vshrl.u32 %v48, 7
    %v50 = vsub.s32 0, %v49
    %v51 = vrot.slane %v46, %v50
    %v55 = vunpack.c.l.b16 %v28
    %v56 = vunpack.c.l.b16 %v29
    %v57 = vpack.c.b16 %v56, %v55
    %v75 = vunpack.c.l.b16 %v30
    %v76 = vunpack.c.l.b16 %v31
    %v77 = vunpack.c.l.b16 %v32
    %v78 = vunpack.c.l.b16 %v33
    %v79 = vunpack.c.l.b16 %v34
    %v80 = vunpack.c.l.b16 %v35
    %v81 = vunpack.c.l.b16 %v36
    %v82 = vunpack.c.l.b16 %v37
    %v83 = vunpack.c.l.b16 %v38
    %v84 = vunpack.c.l.b16 %v39
    %v85 = vunpack.c.l.b16 %v40
    %v86 = vunpack.c.l.b16 %v41
    %v87 = vunpack.c.l.b16 %v42
    %v88 = vunpack.c.l.b16 %v43
    %v89 = vunpack.c.l.b16 %v44
    %v90 = vunpack.c.l.b16 %v45
    %v91 = vpack.c.b16 %v76, %v75
    %v92 = vpack.c.b16 %v78, %v77
    %v93 = vpack.c.b16 %v80, %v79
    %v94 = vpack.c.b16 %v82, %v81
    %v95 = vpack.c.b16 %v84, %v83
    %v96 = vpack.c.b16 %v86, %v85
    %v97 = vpack.c.b16 %v88, %v87
    %v98 = vpack.c.b16 %v90, %v89
    %107 = vmatprep.subr.bf16.mxu0 0
    %108 = vmatpush1.bf16.msra.mxu0 %v98
    %109 = vmatprep.subr.bf16.mxu0 0
    %110 = vmatpush1.bf16.msra.mxu0 %v97
    %111 = vmatprep.subr.bf16.mxu0 0
    %112 = vmatpush1.bf16.msra.mxu0 %v96
    %113 = vmatprep.subr.bf16.mxu0 0
    %114 = vmatpush1.bf16.msra.mxu0 %v95
    %115 = vmatprep.subr.bf16.mxu0 0
    %116 = vmatpush1.bf16.msra.mxu0 %v94
    %117 = vmatprep.subr.bf16.mxu0 0
    %118 = vmatpush1.bf16.msra.mxu0 %v93
    %119 = vmatprep.subr.bf16.mxu0 0
    %120 = vmatpush1.bf16.msra.mxu0 %v92
    %121 = vmatprep.subr.bf16.mxu0 0
    %122 = vmatpush1.bf16.msra.mxu0 %v91
    %123 = vmatprep.subr.bf16.mxu0 0
    %124 = vmatpush2.bf16.msra.mxu0 0
    %125 = vmatprep.subr.bf16.mxu0 0
    %126 = vmatpush2.bf16.msra.mxu0 0
    %127 = vmatprep.subr.bf16.mxu0 0
    %128 = vmatpush2.bf16.msra.mxu0 0
    %129 = vmatprep.subr.bf16.mxu0 0
    %130 = vmatpush2.bf16.msra.mxu0 0
    %131 = vmatprep.subr.bf16.mxu0 0
    %132 = vmatpush2.bf16.msra.mxu0 0
    %133 = vmatprep.subr.bf16.mxu0 0
    %134 = vmatpush2.bf16.msra.mxu0 0
    %135 = vmatprep.subr.bf16.mxu0 0
    %136 = vmatpush2.bf16.msra.mxu0 0
    %137 = vmatprep.subr.bf16.mxu0 0
    %138 = vmatpush2.bf16.msra.mxu0 0
    %139 = vmatprep.mubr.bf16.mxu0 0
    %140 = vmatmul.mubr.bf16.gmra.mxu0 %v57
    %v141 = vpop.f32.mrf.mxu0
    %v142 = vadd.f32 %v51, %v141
    %v143 = vpop.f32.mrf.mxu0
    %v144 = vpop.f32.mrf.mxu0
    %v145 = vadd.f32 %v51, %v144
    %v146 = vpop.f32.mrf.mxu0
    %147 = vdwg.mxu0
    %v148 = vmax.f32 %v142, 0.0
    %v149 = vmax.f32 %v145, 0.0
    %v150 = vpack.c.bf16 %v149, %v148
    %v151 = vld [vmem:[%s3] sm:$0xff]
    %v152 = vld [vmem:[%s3 + $0x8] sm:$0xff]
    %v153 = vld [vmem:[%s3 + $0x10] sm:$0xff]
    %v154 = vld [vmem:[%s3 + $0x18] sm:$0xff]
    %v155 = vld [vmem:[%s3 + $0x20] sm:$0xff]
    %v156 = vld [vmem:[%s3 + $0x28] sm:$0xff]
    %v157 = vld [vmem:[%s3 + $0x30] sm:$0xff]
    %v158 = vld [vmem:[%s3 + $0x38] sm:$0xff]
    %v159 = vld [vmem:[%s3 + $0x40] sm:$0xff]
    %v160 = vld [vmem:[%s3 + $0x48] sm:$0xff]
    %v161 = vld [vmem:[%s3 + $0x50] sm:$0xff]
    %v162 = vld [vmem:[%s3 + $0x58] sm:$0xff]
    %v163 = vld [vmem:[%s3 + $0x60] sm:$0xff]
    %v164 = vld [vmem:[%s3 + $0x68] sm:$0xff]
    %v165 = vld [vmem:[%s3 + $0x70] sm:$0xff]
    %v166 = vld [vmem:[%s3 + $0x78] sm:$0xff]
    %v167 = vld [vmem:[%s4] sm:$0x3]
    %v169 = vlaneseq
    %v170 = vshrl.u32 %v169, 7
    %v171 = vsub.s32 0, %v170
    %v172 = vrot.slane %v167, %v171
    %v173 = vlaneseq
    %v174 = vshrl.u32 %v173, 7
    %v175 = vsub.s32 1, %v174
    %v176 = vrot.slane %v167, %v175
    %v195 = vunpack.c.l.b16 %v151
    %v196 = vunpack.c.h.b16 %v151
    %v197 = vunpack.c.l.b16 %v152
    %v198 = vunpack.c.h.b16 %v152
    %v199 = vunpack.c.l.b16 %v153
    %v200 = vunpack.c.h.b16 %v153
    %v201 = vunpack.c.l.b16 %v154
    %v202 = vunpack.c.h.b16 %v154
    %v203 = vunpack.c.l.b16 %v155
    %v204 = vunpack.c.h.b16 %v155
    %v205 = vunpack.c.l.b16 %v156
    %v206 = vunpack.c.h.b16 %v156
    %v207 = vunpack.c.l.b16 %v157
    %v208 = vunpack.c.h.b16 %v157
    %v209 = vunpack.c.l.b16 %v158
    %v210 = vunpack.c.h.b16 %v158
    %v211 = vunpack.c.l.b16 %v159
    %v212 = vunpack.c.h.b16 %v159
    %v213 = vunpack.c.l.b16 %v160
    %v214 = vunpack.c.h.b16 %v160
    %v215 = vunpack.c.l.b16 %v161
    %v216 = vunpack.c.h.b16 %v161
    %v217 = vunpack.c.l.b16 %v162
    %v218 = vunpack.c.h.b16 %v162
    %v219 = vunpack.c.l.b16 %v163
    %v220 = vunpack.c.h.b16 %v163
    %v221 = vunpack.c.l.b16 %v164
    %v222 = vunpack.c.h.b16 %v164
    %v223 = vunpack.c.l.b16 %v165
    %v224 = vunpack.c.h.b16 %v165
    %v225 = vunpack.c.l.b16 %v166
    %v226 = vunpack.c.h.b16 %v166
    %v227 = vpack.c.b16 %v197, %v195
    %v228 = vpack.c.b16 %v198, %v196
    %v229 = vpack.c.b16 %v201, %v199
    %v230 = vpack.c.b16 %v202, %v200
    %v231 = vpack.c.b16 %v205, %v203
    %v232 = vpack.c.b16 %v206, %v204
    %v233 = vpack.c.b16 %v209, %v207
    %v234 = vpack.c.b16 %v210, %v208
    %v235 = vpack.c.b16 %v213, %v211
    %v236 = vpack.c.b16 %v214, %v212
    %v237 = vpack.c.b16 %v217, %v215
    %v238 = vpack.c.b16 %v218, %v216
    %v239 = vpack.c.b16 %v221, %v219
    %v240 = vpack.c.b16 %v222, %v220
    %v241 = vpack.c.b16 %v225, %v223
    %v242 = vpack.c.b16 %v226, %v224
    %259 = vmatprep.subr.bf16.mxu0 %v242
    %260 = vmatpush1.bf16.msra.mxu0 %v241
    %261 = vmatprep.subr.bf16.mxu0 %v240
    %262 = vmatpush1.bf16.msra.mxu0 %v239
    %263 = vmatprep.subr.bf16.mxu0 %v238
    %264 = vmatpush1.bf16.msra.mxu0 %v237
    %265 = vmatprep.subr.bf16.mxu0 %v236
    %266 = vmatpush1.bf16.msra.mxu0 %v235
    %267 = vmatprep.subr.bf16.mxu0 %v234
    %268 = vmatpush1.bf16.msra.mxu0 %v233
    %269 = vmatprep.subr.bf16.mxu0 %v232
    %270 = vmatpush1.bf16.msra.mxu0 %v231
    %271 = vmatprep.subr.bf16.mxu0 %v230
    %272 = vmatpush1.bf16.msra.mxu0 %v229
    %273 = vmatprep.subr.bf16.mxu0 %v228
    %274 = vmatpush1.bf16.msra.mxu0 %v227
    %275 = vmatprep.subr.bf16.mxu0 0
    %276 = vmatpush2.bf16.msra.mxu0 0
    %277 = vmatprep.subr.bf16.mxu0 0
    %278 = vmatpush2.bf16.msra.mxu0 0
    %279 = vmatprep.subr.bf16.mxu0 0
    %280 = vmatpush2.bf16.msra.mxu0 0
    %281 = vmatprep.subr.bf16.mxu0 0
    %282 = vmatpush2.bf16.msra.mxu0 0
    %283 = vmatprep.subr.bf16.mxu0 0
    %284 = vmatpush2.bf16.msra.mxu0 0
    %285 = vmatprep.subr.bf16.mxu0 0
    %286 = vmatpush2.bf16.msra.mxu0 0
    %287 = vmatprep.subr.bf16.mxu0 0
    %288 = vmatpush2.bf16.msra.mxu0 0
    %289 = vmatprep.subr.bf16.mxu0 0
    %290 = vmatpush2.bf16.msra.mxu0 0
    %291 = vmatprep.mubr.bf16.mxu0 0
    %292 = vmatmul.mubr.bf16.gmra.mxu0 %v150
    %v293 = vpop.f32.mrf.mxu0
    %v294 = vadd.f32 %v172, %v293
    %v295 = vpop.f32.mrf.mxu0
    %v296 = vadd.f32 %v176, %v295
    %v297 = vpop.f32.mrf.mxu0
    %v298 = vadd.f32 %v172, %v297
    %v299 = vpop.f32.mrf.mxu0
    %v300 = vadd.f32 %v176, %v299
    %301 = vdwg.mxu0
    %v302 = vmax.f32 %v294, 0.0
    %v303 = vmax.f32 %v296, 0.0
    %v304 = vmax.f32 %v298, 0.0
    %v305 = vmax.f32 %v300, 0.0
    %v306 = vpack.c.bf16 %v304, %v302
    %v307 = vpack.c.bf16 %v305, %v303
    %v308 = vld [vmem:[%s5] sm:$0xf]
    %v309 = vld [vmem:[%s5 + $0x4] sm:$0xf]
    %v310 = vld [vmem:[%s5 + $0x8] sm:$0xf]
    %v311 = vld [vmem:[%s5 + $0xc] sm:$0xf]
    %v312 = vld [vmem:[%s5 + $0x10] sm:$0xf]
    %v313 = vld [vmem:[%s5 + $0x14] sm:$0xf]
    %v314 = vld [vmem:[%s5 + $0x18] sm:$0xf]
    %v315 = vld [vmem:[%s5 + $0x1c] sm:$0xf]
    %v316 = vld [vmem:[%s5 + $0x20] sm:$0xf]
    %v317 = vld [vmem:[%s5 + $0x24] sm:$0xf]
    %v318 = vld [vmem:[%s5 + $0x28] sm:$0xf]
    %v319 = vld [vmem:[%s5 + $0x2c] sm:$0xf]
    %v320 = vld [vmem:[%s5 + $0x30] sm:$0xf]
    %v321 = vld [vmem:[%s5 + $0x34] sm:$0xf]
    %v322 = vld [vmem:[%s5 + $0x38] sm:$0xf]
    %v323 = vld [vmem:[%s5 + $0x3c] sm:$0xf]
    %v324 = vld [vmem:[%s5 + $0x40] sm:$0xf]
    %v325 = vld [vmem:[%s5 + $0x44] sm:$0xf]
    %v326 = vld [vmem:[%s5 + $0x48] sm:$0xf]
    %v327 = vld [vmem:[%s5 + $0x4c] sm:$0xf]
    %v328 = vld [vmem:[%s5 + $0x50] sm:$0xf]
    %v329 = vld [vmem:[%s5 + $0x54] sm:$0xf]
    %v330 = vld [vmem:[%s5 + $0x58] sm:$0xf]
    %v331 = vld [vmem:[%s5 + $0x5c] sm:$0xf]
    %v332 = vld [vmem:[%s5 + $0x60] sm:$0xf]
    %v333 = vld [vmem:[%s5 + $0x64] sm:$0xf]
    %v334 = vld [vmem:[%s5 + $0x68] sm:$0xf]
    %v335 = vld [vmem:[%s5 + $0x6c] sm:$0xf]
    %v336 = vld [vmem:[%s5 + $0x70] sm:$0xf]
    %v337 = vld [vmem:[%s5 + $0x74] sm:$0xf]
    %v338 = vld [vmem:[%s5 + $0x78] sm:$0xf]
    %v339 = vld [vmem:[%s5 + $0x7c] sm:$0xf]
    %v340 = vld [vmem:[%s6] sm:$0x1]
    %v342 = vlaneseq
    %v343 = vshrl.u32 %v342, 7
    %v344 = vsub.s32 0, %v343
    %v345 = vrot.slane %v340, %v344
    %v379 = vunpack.c.l.b16 %v308
    %v380 = vunpack.c.l.b16 %v309
    %v381 = vunpack.c.l.b16 %v310
    %v382 = vunpack.c.l.b16 %v311
    %v383 = vunpack.c.l.b16 %v312
    %v384 = vunpack.c.l.b16 %v313
    %v385 = vunpack.c.l.b16 %v314
    %v386 = vunpack.c.l.b16 %v315
    %v387 = vunpack.c.l.b16 %v316
    %v388 = vunpack.c.l.b16 %v317
    %v389 = vunpack.c.l.b16 %v318
    %v390 = vunpack.c.l.b16 %v319
    %v391 = vunpack.c.l.b16 %v320
    %v392 = vunpack.c.l.b16 %v321
    %v393 = vunpack.c.l.b16 %v322
    %v394 = vunpack.c.l.b16 %v323
    %v395 = vunpack.c.l.b16 %v324
    %v396 = vunpack.c.l.b16 %v325
    %v397 = vunpack.c.l.b16 %v326
    %v398 = vunpack.c.l.b16 %v327
    %v399 = vunpack.c.l.b16 %v328
    %v400 = vunpack.c.l.b16 %v329
    %v401 = vunpack.c.l.b16 %v330
    %v402 = vunpack.c.l.b16 %v331
    %v403 = vunpack.c.l.b16 %v332
    %v404 = vunpack.c.l.b16 %v333
    %v405 = vunpack.c.l.b16 %v334
    %v406 = vunpack.c.l.b16 %v335
    %v407 = vunpack.c.l.b16 %v336
    %v408 = vunpack.c.l.b16 %v337
    %v409 = vunpack.c.l.b16 %v338
    %v410 = vunpack.c.l.b16 %v339
    %v411 = vpack.c.b16 %v380, %v379
    %v412 = vpack.c.b16 %v382, %v381
    %v413 = vpack.c.b16 %v384, %v383
    %v414 = vpack.c.b16 %v386, %v385
    %v415 = vpack.c.b16 %v388, %v387
    %v416 = vpack.c.b16 %v390, %v389
    %v417 = vpack.c.b16 %v392, %v391
    %v418 = vpack.c.b16 %v394, %v393
    %v419 = vpack.c.b16 %v396, %v395
    %v420 = vpack.c.b16 %v398, %v397
    %v421 = vpack.c.b16 %v400, %v399
    %v422 = vpack.c.b16 %v402, %v401
    %v423 = vpack.c.b16 %v404, %v403
    %v424 = vpack.c.b16 %v406, %v405
    %v425 = vpack.c.b16 %v408, %v407
    %v426 = vpack.c.b16 %v410, %v409
    %443 = vmatprep.subr.bf16.mxu0 0
    %444 = vmatpush1.bf16.msra.mxu0 %v418
    %445 = vmatprep.subr.bf16.mxu0 0
    %446 = vmatpush1.bf16.msra.mxu0 %v417
    %447 = vmatprep.subr.bf16.mxu0 0
    %448 = vmatpush1.bf16.msra.mxu0 %v416
    %449 = vmatprep.subr.bf16.mxu0 0
    %450 = vmatpush1.bf16.msra.mxu0 %v415
    %451 = vmatprep.subr.bf16.mxu0 0
    %452 = vmatpush1.bf16.msra.mxu0 %v414
    %453 = vmatprep.subr.bf16.mxu0 0
    %454 = vmatpush1.bf16.msra.mxu0 %v413
    %455 = vmatprep.subr.bf16.mxu0 0
    %456 = vmatpush1.bf16.msra.mxu0 %v412
    %457 = vmatprep.subr.bf16.mxu0 0
    %458 = vmatpush1.bf16.msra.mxu0 %v411
    %459 = vmatprep.subr.bf16.mxu0 0
    %460 = vmatpush2.bf16.msra.mxu0 %v426
    %461 = vmatprep.subr.bf16.mxu0 0
    %462 = vmatpush2.bf16.msra.mxu0 %v425
    %463 = vmatprep.subr.bf16.mxu0 0
    %464 = vmatpush2.bf16.msra.mxu0 %v424
    %465 = vmatprep.subr.bf16.mxu0 0
    %466 = vmatpush2.bf16.msra.mxu0 %v423
    %467 = vmatprep.subr.bf16.mxu0 0
    %468 = vmatpush2.bf16.msra.mxu0 %v422
    %469 = vmatprep.subr.bf16.mxu0 0
    %470 = vmatpush2.bf16.msra.mxu0 %v421
    %471 = vmatprep.subr.bf16.mxu0 0
    %472 = vmatpush2.bf16.msra.mxu0 %v420
    %473 = vmatprep.subr.bf16.mxu0 0
    %474 = vmatpush2.bf16.msra.mxu0 %v419
    %475 = vmatprep.mubr.bf16.mxu0 %v307
    %476 = vmatmul.mubr.bf16.gmra.mxu0 %v306
    %v477 = vpop.f32.mrf.mxu0
    %v478 = vadd.f32 %v345, %v477
    %v479 = vpop.f32.mrf.mxu0
    %v480 = vpop.f32.mrf.mxu0
    %v481 = vadd.f32 %v345, %v480
    %v482 = vpop.f32.mrf.mxu0
    %483 = vdwg.mxu0
    %484 = vst [vmem:[#allocation2] sm:$0xff] %v478
    %485 = vst [vmem:[#allocation2 + $0x8] sm:$0xff] %v481
    // Predicated region
    $region30: #{description_feed_forward.1} parent=1 // pred_check
      _
    $region31: #{description_feed_forward.1} parent=1 // pred_check_branch
      %487 = sbr.rel (0) target = $region33
    $region32: #{description_feed_forward.1} parent=1 // pred_region
      %s489 = ssub.s32 256, 256
      %490 = vsyncadd [#allocation3], %s489
      %s491 = sshll.u32 [#allocation2], 4
      %s492 = int_to_ptr.vmem [resolvable:$true] %s491
      %497 = dma.vmem_to_hbm [thread:$0]  %s492, 256, %s7, [#allocation3], 128, 128, 8
    $region33: #{description_feed_forward.1} parent=1 // pred_fallthru
      _
    // Predicated region
    $region34: #{description_feed_forward.1} parent=1 // pred_check
      _
    $region35: #{description_feed_forward.1} parent=1 // pred_check_branch
      %499 = sbr.rel (0) target = $region37
    $region36: #{description_feed_forward.1} parent=1 // pred_region
      %500 = dma.done [#allocation3], 256
    $region37: #{description_feed_forward.1} parent=1 // pred_fallthru
      _
    %501 = vsyncpa [#allocation3], 1

</llo_original>
